<compile_context>
chip_gen: v6e
topology: v6e:2x2x1
jax: 0.10.0
libtpu: 0.0.40
codegen_flags: <defaults>
</compile_context>

<pallas_src>
import functools

import jax
import jax.numpy as jnp
from jax.experimental import pallas as pl
from jax.experimental.pallas import tpu as pltpu

_MIB = 1 << 20


# ---------------------------------------------------------------------------
# Path A: fused single-pass kernel (whole (C, HW) slab resident in VMEM).
# ---------------------------------------------------------------------------
def _fused_kernel(x_ref, w_ref, b_ref, o_ref):
    # x_ref: (1, C, HW)   w_ref: (C, C)   b_ref: (C, 1)   o_ref: (1, C, HW)
    x = x_ref[0]                                                   # (C, HW), input dtype
    inv_hw = 1.0 / x.shape[-1]
    # Global average pool: f32 accumulation without materializing an f32 copy
    # of the slab.
    mean = jnp.sum(x, axis=-1, keepdims=True, dtype=jnp.float32) * inv_hw   # (C, 1)
    # 1x1 conv over channels == (C_out, C_in) @ (C_in, 1) matmul + bias.
    # (1-lane-wide MXU output; negligible FLOPs, kept simple on this path.)
    y = jnp.dot(w_ref[...].astype(jnp.float32), mean,
                preferred_element_type=jnp.float32)
    y = y + b_ref[...].astype(jnp.float32)
    # Hardsigmoid (PyTorch): clamp(y/6 + 0.5, 0, 1)
    att = jnp.clip(y * (1.0 / 6.0) + 0.5, 0.0, 1.0)                # (C, 1) f32
    # Broadcast multiply in the *input* dtype: one load, one mul, one store per
    # vreg (keeps v5e's single vector-store slot the only limiter).
    o_ref[0] = x * att.astype(o_ref.dtype)


# ---------------------------------------------------------------------------
# Path B kernels: tiled reduce -> tiny attention -> tiled apply.
# ---------------------------------------------------------------------------
def _reduce_kernel(x_ref, sum_ref):
    # x_ref: (1, C, T)   sum_ref: (1, C, 1) f32, resident across the t axis.
    @pl.when(pl.program_id(1) == 0)
    def _():
        sum_ref[...] = jnp.zeros_like(sum_ref)

    sum_ref[0] += jnp.sum(x_ref[0], axis=-1, keepdims=True, dtype=jnp.float32)


def _att_from_sums_kernel(sum_ref, wt_ref, b_ref, att_ref, *, inv_hw):
    # sum_ref: (N, C, 1) f32   wt_ref: (C_in, C_out)   b_ref: (1, C_out)
    # att_ref: (N, C, 1) f32
    sums = sum_ref[...]                                            # (N, C, 1)
    means = sums[:, :, 0] * inv_hw                                 # (N, C), lane-dense
    # Single batched matmul for all N means (instead of N 1-lane matmuls).
    y = jnp.dot(means, wt_ref[...].astype(jnp.float32),
                preferred_element_type=jnp.float32)                # (N, C)
    y = y + b_ref[...].astype(jnp.float32)
    att = jnp.clip(y * (1.0 / 6.0) + 0.5, 0.0, 1.0)
    att_ref[...] = att[:, :, None]


def _apply_kernel(x_ref, att_ref, o_ref):
    # x_ref: (1, C, T)   att_ref: (1, C, 1) f32   o_ref: (1, C, T)
    o_ref[0] = x_ref[0] * att_ref[0].astype(o_ref.dtype)


# ---------------------------------------------------------------------------
# Helpers.
# ---------------------------------------------------------------------------
def _vmem_capacity_bytes():
    """Per-core VMEM capacity; conservative (v7x = 64 MiB) fallback."""
    try:
        cap = int(pltpu.get_tpu_info().vmem_capacity_bytes)
        if cap > 0:
            return cap
    except Exception:
        pass
    return 64 * _MIB


def _pick_hw_tile(hw, c, itemsize, budget_bytes, max_hw_tile):
    """Lane-dense (multiple-of-128) spatial tile dividing HW, bounded by VMEM."""
    if hw % 128 != 0:
        # TODO(synk): ragged spatial extents (HW not a multiple of 128) fall back
        # to one full-HW block; add masked tiling if such shapes get large.
        return hw
    max_by_vmem = budget_bytes // max(1, 4 * c * itemsize)
    cap = min(max_hw_tile, max_by_vmem, hw)
    cap = max(128, (cap // 128) * 128)
    t = cap
    while t >= 128:
        if hw % t == 0:
            return t
        t -= 128
    return hw


# ---------------------------------------------------------------------------
# pallas_call wrappers.
# ---------------------------------------------------------------------------
def _channel_attention_fused(x_flat, w2d, bias, budget, need_fused):
    N, C, HW = x_flat.shape
    isz = x_flat.dtype.itemsize
    b_col = bias.reshape(C, 1)
    vmem_limit = int(min(budget, max(need_fused + 8 * _MIB, 32 * _MIB)))
    cost = pl.CostEstimate(
        flops=int(N * (2 * C * HW + 2 * C * C + 5 * C)),
        transcendentals=0,
        bytes_accessed=int(2 * N * C * HW * isz
                           + C * C * w2d.dtype.itemsize
                           + C * bias.dtype.itemsize),
    )
    return pl.pallas_call(
        _fused_kernel,
        out_shape=jax.ShapeDtypeStruct((N, C, HW), x_flat.dtype),
        grid_spec=pltpu.PrefetchScalarGridSpec(
            num_scalar_prefetch=0,
            grid=(N,),
            in_specs=[
                pl.BlockSpec((1, C, HW), lambda n: (n, 0, 0)),
                pl.BlockSpec((C, C), lambda n: (0, 0)),   # constant index -> fetched once
                pl.BlockSpec((C, 1), lambda n: (0, 0)),
            ],
            out_specs=pl.BlockSpec((1, C, HW), lambda n: (n, 0, 0)),
        ),
        compiler_params=pltpu.CompilerParams(
            dimension_semantics=("parallel",),
            vmem_limit_bytes=vmem_limit,
        ),
        cost_estimate=cost,
    )(x_flat, w2d, b_col)


def _channel_attention_two_pass(x_flat, w2d, bias, budget, max_hw_tile):
    N, C, HW = x_flat.shape
    isz = x_flat.dtype.itemsize
    w_isz = w2d.dtype.itemsize

    # Lane-dense spatial tile; keeps double-buffered in/out tiles to a few MiB
    # so streamed passes fit any generation's VMEM (incl. v7x's 64 MiB).
    tile_budget = min(budget, 24 * _MIB)
    T = _pick_hw_tile(HW, C, isz, tile_budget, max_hw_tile)
    n_t = HW // T
    assert n_t * T == HW
    stream_vmem = int(min(budget, max(4 * C * T * isz + 8 * _MIB, 32 * _MIB)))

    # Pass 1: per-(batch, channel) spatial sums, accumulated in f32.
    sums = pl.pallas_call(
        _reduce_kernel,
        out_shape=jax.ShapeDtypeStruct((N, C, 1), jnp.float32),
        grid_spec=pltpu.PrefetchScalarGridSpec(
            num_scalar_prefetch=0,
            grid=(N, n_t),
            in_specs=[pl.BlockSpec((1, C, T), lambda n, t: (n, 0, t))],
            out_specs=pl.BlockSpec((1, C, 1), lambda n, t: (n, 0, 0)),
        ),
        compiler_params=pltpu.CompilerParams(
            dimension_semantics=("parallel", "arbitrary"),
            vmem_limit_bytes=stream_vmem,
        ),
        cost_estimate=pl.CostEstimate(
            flops=int(N * C * HW),
            transcendentals=0,
            bytes_accessed=int(N * C * HW * isz + N * C * 4),
        ),
    )(x_flat)

    # Pass 2 (tiny): batched 1x1 conv + hardsigmoid for all N means at once.
    wt = jnp.transpose(w2d)                       # (C_in, C_out); layout plumbing only
    b_row = bias.reshape(1, C)
    att = pl.pallas_call(
        functools.partial(_att_from_sums_kernel, inv_hw=1.0 / HW),
        out_shape=jax.ShapeDtypeStruct((N, C, 1), jnp.float32),
        grid_spec=pltpu.PrefetchScalarGridSpec(
            num_scalar_prefetch=0,
            grid=(1,),
            in_specs=[
                pl.BlockSpec((N, C, 1), lambda i: (0, 0, 0)),
                pl.BlockSpec((C, C), lambda i: (0, 0)),
                pl.BlockSpec((1, C), lambda i: (0, 0)),
            ],
            out_specs=pl.BlockSpec((N, C, 1), lambda i: (0, 0, 0)),
        ),
        compiler_params=pltpu.CompilerParams(
            dimension_semantics=("arbitrary",),
        ),
        cost_estimate=pl.CostEstimate(
            flops=int(2 * N * C * C + 5 * N * C),
            transcendentals=0,
            bytes_accessed=int(2 * N * C * 4 + C * C * w_isz + C * bias.dtype.itemsize),
        ),
    )(sums, wt, b_row)

    # Pass 3: broadcast multiply; fully parallel (batch x spatial-tiles) grid so
    # both v7x TensorCores get work even at batch size 1.
    out = pl.pallas_call(
        _apply_kernel,
        out_shape=jax.ShapeDtypeStruct((N, C, HW), x_flat.dtype),
        grid_spec=pltpu.PrefetchScalarGridSpec(
            num_scalar_prefetch=0,
            grid=(N, n_t),
            in_specs=[
                pl.BlockSpec((1, C, T), lambda n, t: (n, 0, t)),
                pl.BlockSpec((1, C, 1), lambda n, t: (n, 0, 0)),
            ],
            out_specs=pl.BlockSpec((1, C, T), lambda n, t: (n, 0, t)),
        ),
        compiler_params=pltpu.CompilerParams(
            dimension_semantics=("parallel", "parallel"),
            vmem_limit_bytes=stream_vmem,
        ),
        cost_estimate=pl.CostEstimate(
            flops=int(N * C * HW),
            transcendentals=0,
            bytes_accessed=int(2 * N * C * HW * isz + N * C * 4),
        ),
    )(x_flat, att)
    return out


def channel_attention(x, weight, bias, *, force_two_pass=None, max_hw_tile=2048):
    """ChannelAttention forward.

    x: (N, C, H, W); weight: (C_out, C_in, 1, 1); bias: (C_out,). Returns (N, C, H, W).
    force_two_pass: None = auto (VMEM-fit heuristic), False = fused resident path,
                    True = tiled reduce -> attention -> apply path.
    """
    N, C, H, W = x.shape
    c_out, c_in = weight.shape[0], weight.shape[1]
    # The PyTorch module multiplies x by an (N, C_out, 1, 1) gate; broadcasting
    # requires C_out == C, i.e. reduction_ratio == 1 (the module default).
    assert c_in == C and c_out == C, (
        "ChannelAttention kernel assumes reduction_ratio=1 (C_out == C_in == C)")
    HW = H * W
    isz = x.dtype.itemsize
    w_isz = weight.dtype.itemsize

    x_flat = x.reshape(N, C, HW)
    w2d = weight.reshape(c_out, c_in)

    capacity = _vmem_capacity_bytes()
    budget = capacity - 8 * _MIB                 # headroom for Mosaic internals

    # Fused-path VMEM need: double-buffered input + output slabs + weights.
    need_fused = 4 * C * HW * isz + 2 * C * C * w_isz + 4 * C * 4 + 2 * _MIB

    if force_two_pass is None:
        use_fused = need_fused <= budget
    else:
        use_fused = not force_two_pass

    if use_fused:
        out_flat = _channel_attention_fused(x_flat, w2d, bias, budget, need_fused)
    else:
        out_flat = _channel_attention_two_pass(x_flat, w2d, bias, budget, max_hw_tile)
    return out_flat.reshape(N, C, H, W)


def _reference(x, weight, bias):
    # Pure-JAX reference matching the PyTorch module semantics.
    mean = jnp.mean(x, axis=(2, 3), keepdims=True)                       # (N,C,1,1)
    w2d = weight.reshape(weight.shape[0], weight.shape[1])               # (Co,Ci)
    y = jnp.einsum("oc,ncij->noij", w2d, mean) + bias.reshape(1, -1, 1, 1)
    att = jnp.clip(y / 6.0 + 0.5, 0.0, 1.0)
    return x * att


if __name__ == "__main__":
    key = jax.random.PRNGKey(0)
    k_x, k_w, k_b, k_x2 = jax.random.split(key, 4)

    # Small canonical shapes.
    N, C, H, W = 2, 4, 16, 16
    x = jax.random.normal(k_x, (N, C, H, W), dtype=jnp.float32)
    weight = jax.random.normal(k_w, (C, C, 1, 1), dtype=jnp.float32) * 0.1
    bias = jax.random.normal(k_b, (C,), dtype=jnp.float32) * 0.1
    ref = _reference(x, weight, bias)

    # Fused resident path.
    out_fused = channel_attention(x, weight, bias, force_two_pass=False)
    jax.block_until_ready(out_fused)
    assert out_fused.shape == (N, C, H, W)
    assert jnp.allclose(out_fused, ref, atol=1e-5, rtol=1e-5), "fused path mismatch"

    # Tiled two-pass path on the same shape.
    out_tiled = channel_attention(x, weight, bias, force_two_pass=True)
    jax.block_until_ready(out_tiled)
    assert jnp.allclose(out_tiled, ref, atol=1e-5, rtol=1e-5), "two-pass path mismatch"

    # Exercise the multi-tile two-pass path (used for large RTMDet feature maps
    # / v7x) on a modest shape with a small forced tile (HW=4096, T=512 -> 8 tiles).
    N2, C2, H2, W2 = 2, 8, 64, 64
    k_w2, k_b2 = jax.random.split(k_b)
    x2 = jax.random.normal(k_x2, (N2, C2, H2, W2), dtype=jnp.float32)
    w2 = jax.random.normal(k_w2, (C2, C2, 1, 1), dtype=jnp.float32) * 0.1
    b2 = jax.random.normal(k_b2, (C2,), dtype=jnp.float32) * 0.1
    out2 = channel_attention(x2, w2, b2, force_two_pass=True, max_hw_tile=512)
    jax.block_until_ready(out2)
    assert jnp.allclose(out2, _reference(x2, w2, b2), atol=1e-5, rtol=1e-5), \
        "tiled multi-block path mismatch"

    # Auto path selection (picks the fused resident path at these sizes).
    out_auto = channel_attention(x, weight, bias)
    jax.block_until_ready(out_auto)
    assert jnp.allclose(out_auto, ref, atol=1e-5, rtol=1e-5), "auto path mismatch"

    print("KERNEL_OK")
</pallas_src>

<mosaic_0001>
module attributes {stable_mosaic.version = 11 : i64} {
  func.func @_fused_kernel(%arg0: i32, %arg1: memref<1x4x256xf32, #tpu.memory_space<vmem>>, %arg2: memref<4x4xf32, #tpu.memory_space<vmem>>, %arg3: memref<4x1xf32, #tpu.memory_space<vmem>>, %arg4: memref<1x4x256xf32, #tpu.memory_space<vmem>>) attributes {dimension_semantics = [#tpu.dimension_semantics<parallel>], iteration_bounds = array<i64: 2>, scalar_prefetch = 0 : i64, scratch_operands = 0 : i64, tpu.core_type = #tpu.core_type<tc>, window_params = [{transform_indices = @transform_0, window_bounds = array<i64: 1, 4, 256>}, {pipeline_mode = #tpu.pipeline_mode<synchronous>, transform_indices = @transform_1, window_bounds = array<i64: 4, 4>}, {pipeline_mode = #tpu.pipeline_mode<synchronous>, transform_indices = @transform_2, window_bounds = array<i64: 4, 1>}, {transform_indices = @transform_3, window_bounds = array<i64: 1, 4, 256>}]} {
    %c0 = arith.constant 0 : index
    %c0_0 = arith.constant 0 : index
    %c0_1 = arith.constant 0 : index
    %0 = vector.load %arg1[%c0, %c0_0, %c0_1] : memref<1x4x256xf32, #tpu.memory_space<vmem>>, vector<1x4x256xf32>
    %1 = vector.shape_cast %0 : vector<1x4x256xf32> to vector<4x256xf32>
    %cst = arith.constant dense<0.000000e+00> : vector<4xf32>
    %2 = vector.multi_reduction <add>, %1, %cst [1] : vector<4x256xf32> to vector<4xf32>
    %3 = vector.shape_cast %2 : vector<4xf32> to vector<4x1xf32>
    %cst_2 = arith.constant 3.906250e-03 : f32
    %4 = vector.broadcast %cst_2 : f32 to vector<4x1xf32>
    %5 = arith.mulf %3, %4 : vector<4x1xf32>
    %c0_3 = arith.constant 0 : index
    %c0_4 = arith.constant 0 : index
    %6 = vector.load %arg2[%c0_3, %c0_4] : memref<4x4xf32, #tpu.memory_space<vmem>>, vector<4x4xf32>
    %cst_5 = arith.constant dense<0.000000e+00> : vector<4x1xf32>
    %7 = tpu.matmul %6, %5, %cst_5 {dimension_numbers = #tpu.dot_dimension_numbers<[1], [0], [0], [1], [0, 0, 1, 1], [], []>} : vector<4x4xf32>, vector<4x1xf32>, vector<4x1xf32> -> vector<4x1xf32>
    %c0_6 = arith.constant 0 : index
    %c0_7 = arith.constant 0 : index
    %8 = vector.load %arg3[%c0_6, %c0_7] : memref<4x1xf32, #tpu.memory_space<vmem>>, vector<4x1xf32>
    %9 = arith.addf %7, %8 : vector<4x1xf32>
    %cst_8 = arith.constant 0.166666672 : f32
    %10 = vector.broadcast %cst_8 : f32 to vector<4x1xf32>
    %11 = arith.mulf %9, %10 : vector<4x1xf32>
    %cst_9 = arith.constant 5.000000e-01 : f32
    %12 = vector.broadcast %cst_9 : f32 to vector<4x1xf32>
    %13 = arith.addf %11, %12 : vector<4x1xf32>
    %cst_10 = arith.constant 0.000000e+00 : f32
    %cst_11 = arith.constant 1.000000e+00 : f32
    %14 = vector.broadcast %cst_10 : f32 to vector<4x1xf32>
    %15 = arith.maximumf %14, %13 : vector<4x1xf32>
    %16 = vector.broadcast %cst_11 : f32 to vector<4x1xf32>
    %17 = arith.minimumf %16, %15 : vector<4x1xf32>
    %18 = vector.broadcast %17 : vector<4x1xf32> to vector<4x256xf32>
    %19 = arith.mulf %1, %18 : vector<4x256xf32>
    %c0_12 = arith.constant 0 : index
    %c0_13 = arith.constant 0 : index
    %c0_14 = arith.constant 0 : index
    %20 = vector.load %arg4[%c0_12, %c0_13, %c0_14] : memref<1x4x256xf32, #tpu.memory_space<vmem>>, vector<1x4x256xf32>
    %21 = vector.shape_cast %20 : vector<1x4x256xf32> to vector<4x256xf32>
    %22 = vector.shape_cast %19 : vector<4x256xf32> to vector<1x4x256xf32>
    tpu.vector_store %arg4[%c0_12, %c0_13, %c0_14], %22 {strides = array<i32>} : memref<1x4x256xf32, #tpu.memory_space<vmem>>, vector<1x4x256xf32>,
    return
  }
  func.func @transform_0(%arg0: i32) -> (i32, i32, i32) {
    %c0_i32 = arith.constant 0 : i32
    %c0_i32_0 = arith.constant 0 : i32
    %c0_i32_1 = arith.constant 0 : i32
    return %arg0, %c0_i32, %c0_i32_0 : i32, i32, i32
  }
  func.func @transform_1(%arg0: i32) -> (i32, i32) {
    %c0_i32 = arith.constant 0 : i32
    %c0_i32_0 = arith.constant 0 : i32
    %c0_i32_1 = arith.constant 0 : i32
    return %c0_i32, %c0_i32_0 : i32, i32
  }
  func.func @transform_2(%arg0: i32) -> (i32, i32) {
    %c0_i32 = arith.constant 0 : i32
    %c0_i32_0 = arith.constant 0 : i32
    %c0_i32_1 = arith.constant 0 : i32
    return %c0_i32, %c0_i32_0 : i32, i32
  }
  func.func @transform_3(%arg0: i32) -> (i32, i32, i32) {
    %c0_i32 = arith.constant 0 : i32
    %c0_i32_0 = arith.constant 0 : i32
    %c0_i32_1 = arith.constant 0 : i32
    return %arg0, %c0_i32, %c0_i32_0 : i32, i32, i32
  }
}

</mosaic_0001>

<llo_original>
// kernel: tpu_custom_call.1
$region0: #{tpu_custom_call.1}
  #allocation0 [shape = 'u32[]', space=smem, size = 0x4, offset = 0x4, fixed_abs, tag = 'smem constant byte address 0x4 - core index']
  #allocation1 [shape = 'u32[144,128]{1,0:T(1,128)}', space=vmem, size = 0x12000, scoped, tag = 'internal scratch']
  %s0 = inlined_call_operand.hbm [shape: f32[2,4,256], index: 0, kind: input, shape index: {}]
  %s1 = inlined_call_operand.vmem [shape: f32[4,4], index: 1, kind: input, shape index: {}]
  %s2 = inlined_call_operand.vmem [shape: f32[4,1], index: 2, kind: input, shape index: {}]
  %s3 = inlined_call_operand.hbm [shape: f32[2,4,256], index: 3, kind: output, shape index: {}]
  %s4 = sld [smem:[#allocation0]]
  $region49: #{tpu_custom_call.1} parent=0
    _
  %s6 = ssub.s32 1, %s4
  %s7 = scalar_select 0, %s6, %s4
  $region1: #{tpu_custom_call.1} parent=0
    #allocation2 [shape = 'u8[8192]{0}', space=vmem, size = 0x2000, scoped, tag = 'input window, operand 0']
    #allocation3 [shape = 's32[2]{0}', space=sflag, size = 0x8, scoped, tag = 'scoped memory for tpu_custom_call.1']
    #allocation4 [shape = 's32[2]{0}', space=sflag, size = 0x8, scoped, tag = 'scoped memory for tpu_custom_call.1']
    #allocation5 [shape = 'u8[8192]{0}', space=vmem, size = 0x2000, scoped, tag = 'output window, operand 0']
    %8 = vsyncpa [#allocation3], 0
    %s9 = scalar_lea.sflag [#allocation3], 1
    %10 = vsyncpa %s9, 0
    %11 = vsyncpa [#allocation4], 0
    %s12 = scalar_lea.sflag [#allocation4], 1
    %13 = vsyncpa %s12, 0
    loop: start=0, step=1, limit=4
    $region2: #{tpu_custom_call.1} parent=1 // loop_pre_header
      _
    $region3: #{tpu_custom_call.1} parent=1 // loop_header
      %s15 = sphi 0, %s19
      %p16 = scmp.ge.s32.totalorder %s15, 4
      %s25 = sphi 0, %s27
      %s28 = sphi 0, %s25
      %s29 = sphi 0, %s28
      %s45 = sphi 0, %s29
      %s49 = sphi 0, %s49
      %s51 = sphi 0, %s49
      %s52 = sphi 0, %s51
      %s66 = sphi 0, %s52
      %s70 = sphi 0, %s70
      %s72 = sphi 0, %s70
      %s73 = sphi 0, %s72
      %s87 = sphi 0, %s73
      %s93 = sphi 0, %s95
      %s96 = sphi 0, %s93
      %s97 = sphi 0, %s96
      %s113 = sphi 0, %s97
    $region4: #{tpu_custom_call.1} parent=1 // loop_header_branch
      %18 = sbr.rel (%p16) target = $region8
    $region5: #{tpu_custom_call.1} parent=1 // loop_body
      %s20 = ssub.s32 %s15, 1
      %s21 = ssub.s32 %s15, 2
      %s22 = sadd.s32 %s15, 1
      %s23 = ssub.s32 %s15, %s22
      %p24 = scmp.eq.s32.totalorder %s23, 0
      %s26 = sadd.s32 %s25, 1
      %s27 = scalar_select %p24, %s25, %s26
      %p30 = pneg %p24
      %p31 = scmp.eq.s32.totalorder %s15, 1
      %p32 = por %p30, %p31
      %p33 = scmp.ne.s32.totalorder %s25, %s28
      %p34 = scmp.eq.s32.totalorder %s15, 0
      %p35 = por %p33, %p34
      %p36 = scmp.ne.s32.totalorder %s25, %s28
      %p37 = scmp.eq.s32.totalorder %s20, 1
      %p38 = por %p36, %p37
      %p39 = scmp.ne.s32.totalorder %s28, %s29
      %p40 = scmp.eq.s32.totalorder %s20, 0
      %p41 = por %p39, %p40
      %p42 = scmp.ne.s32.totalorder %s28, %s29
      %p43 = scmp.eq.s32.totalorder %s21, 1
      %p44 = por %p42, %p43
      %p46 = scmp.ne.s32.totalorder %s29, %s45
      %p47 = scmp.eq.s32.totalorder %s21, 0
      %p48 = por %p46, %p47
      %s50 = sadd.s32 %s49, 1
      %p53 = scmp.eq.s32.totalorder %s15, 1
      %p54 = scmp.ne.s32.totalorder %s49, %s51
      %p55 = scmp.eq.s32.totalorder %s15, 0
      %p56 = por %p54, %p55
      %p57 = scmp.ne.s32.totalorder %s49, %s51
      %p58 = scmp.eq.s32.totalorder %s20, 1
      %p59 = por %p57, %p58
      %p60 = scmp.ne.s32.totalorder %s51, %s52
      %p61 = scmp.eq.s32.totalorder %s20, 0
      %p62 = por %p60, %p61
      %p63 = scmp.ne.s32.totalorder %s51, %s52
      %p64 = scmp.eq.s32.totalorder %s21, 1
      %p65 = por %p63, %p64
      %p67 = scmp.ne.s32.totalorder %s52, %s66
      %p68 = scmp.eq.s32.totalorder %s21, 0
      %p69 = por %p67, %p68
      %s71 = sadd.s32 %s70, 1
      %p74 = scmp.eq.s32.totalorder %s15, 1
      %p75 = scmp.ne.s32.totalorder %s70, %s72
      %p76 = scmp.eq.s32.totalorder %s15, 0
      %p77 = por %p75, %p76
      %p78 = scmp.ne.s32.totalorder %s70, %s72
      %p79 = scmp.eq.s32.totalorder %s20, 1
      %p80 = por %p78, %p79
      %p81 = scmp.ne.s32.totalorder %s72, %s73
      %p82 = scmp.eq.s32.totalorder %s20, 0
      %p83 = por %p81, %p82
      %p84 = scmp.ne.s32.totalorder %s72, %s73
      %p85 = scmp.eq.s32.totalorder %s21, 1
      %p86 = por %p84, %p85
      %p88 = scmp.ne.s32.totalorder %s73, %s87
      %p89 = scmp.eq.s32.totalorder %s21, 0
      %p90 = por %p88, %p89
      %s91 = ssub.s32 %s15, %s22
      %p92 = scmp.eq.s32.totalorder %s91, 0
      %s94 = sadd.s32 %s93, 1
      %s95 = scalar_select %p92, %s93, %s94
      %p98 = pneg %p92
      %p99 = scmp.eq.s32.totalorder %s15, 1
      %p100 = por %p98, %p99
      %p101 = scmp.ne.s32.totalorder %s93, %s96
      %p102 = scmp.eq.s32.totalorder %s15, 0
      %p103 = por %p101, %p102
      %p104 = scmp.ne.s32.totalorder %s93, %s96
      %p105 = scmp.eq.s32.totalorder %s20, 1
      %p106 = por %p104, %p105
      %p107 = scmp.ne.s32.totalorder %s96, %s97
      %p108 = scmp.eq.s32.totalorder %s20, 0
      %p109 = por %p107, %p108
      %p110 = scmp.ne.s32.totalorder %s96, %s97
      %p111 = scmp.eq.s32.totalorder %s21, 1
      %p112 = por %p110, %p111
      %p114 = scmp.ne.s32.totalorder %s97, %s113
      %p115 = scmp.eq.s32.totalorder %s21, 0
      %p116 = por %p114, %p115
      %p117 = scmp.le.s32.totalorder 1, %s15
      %p118 = scmp.lt.s32.totalorder %s15, 3
      %p119 = pnand %p117, %p118
      %p120 = pneg %p119
      // Predicated region
      $region9: #{tpu_custom_call.1} parent=5 // pred_check
        _
      $region10: #{tpu_custom_call.1} parent=5 // pred_check_branch
        %122 = sbr.rel (%p119) target = $region12
      $region11: #{tpu_custom_call.1} parent=5 // pred_region
        %s123 = ssub.s32 %s15, 1
        // Predicated region
        $region13: #{tpu_custom_call.1} parent=11 // pred_check
          %p124 = pneg %p62
        $region14: #{tpu_custom_call.1} parent=11 // pred_check_branch
          %126 = sbr.rel (%p124) target = $region16
        $region15: #{tpu_custom_call.1} parent=11 // pred_region
          _
        $region16: #{tpu_custom_call.1} parent=11 // pred_fallthru
          _
        // Predicated region
        $region17: #{tpu_custom_call.1} parent=11 // pred_check
          %p127 = pneg %p83
        $region18: #{tpu_custom_call.1} parent=11 // pred_check_branch
          %129 = sbr.rel (%p127) target = $region20
        $region19: #{tpu_custom_call.1} parent=11 // pred_region
          _
        $region20: #{tpu_custom_call.1} parent=11 // pred_fallthru
          _
      $region12: #{tpu_custom_call.1} parent=5 // pred_fallthru
        _
      %p130 = scmp.lt.s32.totalorder %s15, 2
      // Predicated region
      $region21: #{tpu_custom_call.1} parent=5 // pred_check
        %p131 = pneg %p130
      $region22: #{tpu_custom_call.1} parent=5 // pred_check_branch
        %133 = sbr.rel (%p131) target = $region24
      $region23: #{tpu_custom_call.1} parent=5 // pred_region
        // Predicated region
        $region25: #{tpu_custom_call.1} parent=23 // pred_check
          %p134 = pneg %p35
        $region26: #{tpu_custom_call.1} parent=23 // pred_check_branch
          %136 = sbr.rel (%p134) target = $region28
        $region27: #{tpu_custom_call.1} parent=23 // pred_region
          %s137 = sand.u32 %s25, 1
          %s138 = scalar_lea.sflag [#allocation3], %s137
          %s139 = sand.u32 %s25, 1
          %s140 = smul.addr %s139, 8
          %s141 = scalar_lea.vmem [#allocation2], %s140
          %s143 = ssub.s32 128, 128
          %144 = vsyncadd %s138, %s143
          %s145 = smul.addr %s15, 2
          %s146 = smul.addr %s145, 64
          %s147 = scalar_lea.hbm %s0, %s146
          %s149 = sshll.u32 %s141, 4
          %s150 = int_to_ptr.vmem [resolvable:$true] %s149
          %152 = dma.hbm_to_vmem [thread:$0]  %s147, 128, %s150, %s138
        $region28: #{tpu_custom_call.1} parent=23 // pred_fallthru
          _
      $region24: #{tpu_custom_call.1} parent=5 // pred_fallthru
        _
      %p153 = scmp.le.s32.totalorder 1, %s15
      %p154 = scmp.lt.s32.totalorder %s15, 3
      %p155 = pnand %p153, %p154
      %p156 = pneg %p155
      // Predicated region
      $region29: #{tpu_custom_call.1} parent=5 // pred_check
        _
      $region30: #{tpu_custom_call.1} parent=5 // pred_check_branch
        %158 = sbr.rel (%p155) target = $region32
      $region31: #{tpu_custom_call.1} parent=5 // pred_region
        %s159 = ssub.s32 %s15, 1
        %s160 = sand.u32 %s28, 1
        %s161 = scalar_lea.sflag [#allocation3], %s160
        %s162 = sand.u32 %s28, 1
        %s163 = smul.addr %s162, 8
        %s164 = scalar_lea.vmem [#allocation2], %s163
        // Predicated region
        $region33: #{tpu_custom_call.1} parent=31 // pred_check
          %p165 = pneg %p41
        $region34: #{tpu_custom_call.1} parent=31 // pred_check_branch
          %167 = sbr.rel (%p165) target = $region36
        $region35: #{tpu_custom_call.1} parent=31 // pred_region
          %168 = dma.done %s161, 128
        $region36: #{tpu_custom_call.1} parent=31 // pred_fallthru
          _
        %s169 = sand.u32 %s28, 1
        %s170 = scalar_lea.sflag [#allocation3], %s169
        %s171 = sand.u32 %s28, 1
        %s172 = smul.addr %s171, 8
        %s173 = scalar_lea.vmem [#allocation2], %s172
        %p174 = pneg %p41
        %p175 = pneg %p38
        %p176 = pneg %p62
        %p177 = pneg %p59
        %p178 = pneg %p83
        %p179 = pneg %p80
        %p180 = pneg %p109
        %p181 = pneg %p106
        %s182 = sand.u32 %s96, 1
        %s183 = scalar_lea.sflag [#allocation4], %s182
        %s184 = sand.u32 %s96, 1
        %s185 = smul.addr %s184, 8
        %s186 = scalar_lea.vmem [#allocation5], %s185
        %v187 = vld [vmem:[%s164] sm:$0xff]
        %v189 = vcombine.high %v187, %v187
        %vm191 = vcmask 1043456
        %v192 = vsel %vm191, %v187, 0.0
        %v193 = vsel %vm191, %v189, 0.0
        %v194 = vadd.f32 %v192, %v193
        %195 = vadd.xlane.f32.xlu0 %v194
        %v196 = vpop.xlane.xlu0 %195
        %v197 = vmul.f32 %v196, 0.00390625
        %v198 = vld [vmem:[%s1] sm:$0xf]
        %v199 = vld [vmem:[%s2] sm:$0xf]
        %vm200 = vcmask 31744
        %v202 = vsel %vm200, %v198, 0
        %v205 = vsel %vm191, %v197, 0
        %207 = vmatprep.subr.mxu0 0.0
        %208 = vmatpush1.msra.mxu0 0.0
        %209 = vmatprep.subr.mxu0 0.0
        %210 = vmatpush1.msra.mxu0 0.0
        %211 = vmatprep.subr.mxu0 0.0
        %212 = vmatpush1.msra.mxu0 0.0
        %213 = vmatprep.subr.mxu0 0.0
        %214 = vmatpush1.msra.mxu0 0.0
        %215 = vmatprep.subr.mxu0 0.0
        %216 = vmatpush1.msra.mxu0 0.0
        %217 = vmatprep.subr.mxu0 0.0
        %218 = vmatpush1.msra.mxu0 0.0
        %219 = vmatprep.subr.mxu0 0.0
        %220 = vmatpush1.msra.mxu0 0.0
        %221 = vmatprep.subr.mxu0 0.0
        %222 = vmatpush1.msra.mxu0 0.0
        %223 = vmatprep.subr.mxu0 0.0
        %224 = vmatpush1.msra.mxu0 0.0
        %225 = vmatprep.subr.mxu0 0.0
        %226 = vmatpush1.msra.mxu0 0.0
        %227 = vmatprep.subr.mxu0 0.0
        %228 = vmatpush1.msra.mxu0 0.0
        %229 = vmatprep.subr.mxu0 0.0
        %230 = vmatpush1.msra.mxu0 0.0
        %231 = vmatprep.subr.mxu0 0.0
        %232 = vmatpush1.msra.mxu0 0.0
        %233 = vmatprep.subr.mxu0 0.0
        %234 = vmatpush1.msra.mxu0 0.0
        %235 = vmatprep.subr.mxu0 0.0
        %236 = vmatpush1.msra.mxu0 0.0
        %237 = vmatprep.subr.mxu0 0.0
        %238 = vmatpush1.msra.mxu0 %v205
        %239 = vmatprep.subr.mxu0 0.0
        %240 = vmatpush2.msra.mxu0 0.0
        %241 = vmatprep.subr.mxu0 0.0
        %242 = vmatpush2.msra.mxu0 0.0
        %243 = vmatprep.subr.mxu0 0.0
        %244 = vmatpush2.msra.mxu0 0.0
        %245 = vmatprep.subr.mxu0 0.0
        %246 = vmatpush2.msra.mxu0 0.0
        %247 = vmatprep.subr.mxu0 0.0
        %248 = vmatpush2.msra.mxu0 0.0
        %249 = vmatprep.subr.mxu0 0.0
        %250 = vmatpush2.msra.mxu0 0.0
        %251 = vmatprep.subr.mxu0 0.0
        %252 = vmatpush2.msra.mxu0 0.0
        %253 = vmatprep.subr.mxu0 0.0
        %254 = vmatpush2.msra.mxu0 0.0
        %255 = vmatprep.subr.mxu0 0.0
        %256 = vmatpush2.msra.mxu0 0.0
        %257 = vmatprep.subr.mxu0 0.0
        %258 = vmatpush2.msra.mxu0 0.0
        %259 = vmatprep.subr.mxu0 0.0
        %260 = vmatpush2.msra.mxu0 0.0
        %261 = vmatprep.subr.mxu0 0.0
        %262 = vmatpush2.msra.mxu0 0.0
        %263 = vmatprep.subr.mxu0 0.0
        %264 = vmatpush2.msra.mxu0 0.0
        %265 = vmatprep.subr.mxu0 0.0
        %266 = vmatpush2.msra.mxu0 0.0
        %267 = vmatprep.subr.mxu0 0.0
        %268 = vmatpush2.msra.mxu0 0.0
        %269 = vmatprep.subr.mxu0 0.0
        %270 = vmatpush2.msra.mxu0 0.0
        %271 = vmatprep.mubr.f32.mxu0 0.0
        %272 = vmatmul.mubr.f32.gmra.mxu0 %v202
        %v273 = vpop.f32.mrf.mxu0
        %v274 = vadd.f32 %v199, %v273
        %v275 = vpop.f32.mrf.mxu0
        %276 = vdwg.mxu0
        %v277 = vmul.f32 %v274, 0.16666667
        %v278 = vadd.f32 %v277, 0.5
        %v279 = vmax.f32 %v278, 0.0
        %v280 = vmin.f32 %v279, 1.0
        %282 = vset.pattern.permute.xlu0 0
        %283 = vperm.xlu0 %282, %v280
        %v284 = vpop.permute.xlu0 %283
        %v286 = vunpack.c.l.s4 839922192
        %v287 = vunpack.c.0.s8 %v286
        %v288 = vlaneseq
        %v289 = vshrl.u32 %v288, 7
        %v290 = vsub.s32 %v287, %v289
        %v291 = vrot.slane %v284, %v290
        %v293 = vmul.f32 %v187, %v291
        %294 = vst [vmem:[%s186] sm:$0xff] %v293
        %s295 = sand.u32 %s96, 1
        %s296 = scalar_lea.sflag [#allocation4], %s295
        %s297 = sand.u32 %s96, 1
        %s298 = smul.addr %s297, 8
        %s299 = scalar_lea.vmem [#allocation5], %s298
        // Predicated region
        $region37: #{tpu_custom_call.1} parent=31 // pred_check
          %p300 = pneg %p106
        $region38: #{tpu_custom_call.1} parent=31 // pred_check_branch
          %302 = sbr.rel (%p300) target = $region40
        $region39: #{tpu_custom_call.1} parent=31 // pred_region
          %s304 = ssub.s32 128, 128
          %305 = vsyncadd %s296, %s304
          %s306 = smul.addr %s20, 2
          %s307 = smul.addr %s306, 64
          %s308 = scalar_lea.hbm %s3, %s307
          %s310 = sshll.u32 %s299, 4
          %s311 = int_to_ptr.vmem [resolvable:$true] %s310
          %313 = dma.vmem_to_hbm [thread:$0]  %s311, 128, %s308, %s296
        $region40: #{tpu_custom_call.1} parent=31 // pred_fallthru
          _
      $region32: #{tpu_custom_call.1} parent=5 // pred_fallthru
        _
      %p314 = scmp.le.s32.totalorder 2, %s15
      // Predicated region
      $region41: #{tpu_custom_call.1} parent=5 // pred_check
        %p315 = pneg %p314
      $region42: #{tpu_custom_call.1} parent=5 // pred_check_branch
        %317 = sbr.rel (%p315) target = $region44
      $region43: #{tpu_custom_call.1} parent=5 // pred_region
        %s318 = ssub.s32 %s15, 2
        // Predicated region
        $region45: #{tpu_custom_call.1} parent=43 // pred_check
          %p319 = pneg %p112
        $region46: #{tpu_custom_call.1} parent=43 // pred_check_branch
          %321 = sbr.rel (%p319) target = $region48
        $region47: #{tpu_custom_call.1} parent=43 // pred_region
          %s322 = sand.u32 %s97, 1
          %s323 = scalar_lea.sflag [#allocation4], %s322
          %s324 = sand.u32 %s97, 1
          %s325 = smul.addr %s324, 8
          %s326 = scalar_lea.vmem [#allocation5], %s325
          %327 = dma.done %s323, 128
        $region48: #{tpu_custom_call.1} parent=43 // pred_fallthru
          _
      $region44: #{tpu_custom_call.1} parent=5 // pred_fallthru
        _
    $region6: #{tpu_custom_call.1} parent=1 // loop_footer
      %s19 = sadd.s32 1, %s15
    $region7: #{tpu_custom_call.1} parent=1 // loop_footer_branch
      %14 = sbr.rel target = $region3
    $region8: #{tpu_custom_call.1} parent=1 // loop_exit
      _
    %328 = vsyncpa [#allocation3], 1
    %s329 = scalar_lea.sflag [#allocation3], 1
    %330 = vsyncpa %s329, 1
    %331 = vsyncpa [#allocation4], 1
    %s332 = scalar_lea.sflag [#allocation4], 1
    %333 = vsyncpa %s332, 1

</llo_original>
